<compile_context>
chip_gen: v7x
topology: tpu7x:2x2x1
jax: 0.10.0
libtpu: 0.0.40
codegen_flags: <defaults>
</compile_context>

<pallas_src>
import jax
import jax.numpy as jnp
from jax.experimental import pallas as pl
from jax.experimental.pallas import tpu as pltpu

INPUT_SIZE = 2
HIDDEN_SIZE = 5
OUTPUT_SIZE = 1

# Flat parameter layout inside the SMEM scalar vector:
#   [0 : 5)   w1[0, :]   (fc1 weights applied to input feature 0)
#   [5 :10)   w1[1, :]   (fc1 weights applied to input feature 1)
#   [10:15)   b1
#   [15:20)   w2[:, 0]
#   [20]      b2[0]
_OFF_W1 = 0
_OFF_B1 = INPUT_SIZE * HIDDEN_SIZE
_OFF_W2 = _OFF_B1 + HIDDEN_SIZE
_OFF_B2 = _OFF_W2 + HIDDEN_SIZE * OUTPUT_SIZE
_N_PARAMS = _OFF_B2 + OUTPUT_SIZE

_LANES = 512        # lane width of the batch slab (multiple of 128)
_MAX_TILE_R = 512   # rows per grid step -> 2 MiB x-tile + 1 MiB out-tile


def _round_up(x, m):
    return ((x + m - 1) // m) * m


def _cdiv(a, b):
    return -(-a // b)


def _mlp_kernel(p_ref, x_ref, o_ref):
    # p_ref: [21] f32 scalars in SMEM
    # x_ref: [INPUT_SIZE, TILE_R, C] f32 in VMEM (batch dense on sublanes+lanes)
    # o_ref: [TILE_R, C] f32 in VMEM (lane-dense output)

    # Hoist all scalar reads once; fold the sigmoid-as-tanh constants into the
    # scalars at trace time (scalar-unit work, free relative to vector work).
    #   sigmoid(z) = 0.5 + 0.5*tanh(0.5*z)
    #   out = sigmoid(b2 + sum_j w2_j * sigmoid(z_j))
    #       = 0.5 + 0.5*tanh( 0.5*b2 + 0.25*sum_j w2_j
    #                         + sum_j 0.25*w2_j * tanh(0.5*z_j) )
    a = [0.5 * p_ref[_OFF_W1 + j] for j in range(HIDDEN_SIZE)]                # x0 weights
    b = [0.5 * p_ref[_OFF_W1 + HIDDEN_SIZE + j] for j in range(HIDDEN_SIZE)]  # x1 weights
    c = [0.5 * p_ref[_OFF_B1 + j] for j in range(HIDDEN_SIZE)]                # biases
    d = [0.25 * p_ref[_OFF_W2 + j] for j in range(HIDDEN_SIZE)]               # fc2 weights
    base = 0.5 * p_ref[_OFF_B2]
    for j in range(HIDDEN_SIZE):
        base = base + 0.25 * p_ref[_OFF_W2 + j]

    x0 = x_ref[0]   # [TILE_R, C]
    x1 = x_ref[1]   # [TILE_R, C]

    acc = None
    for j in range(HIDDEN_SIZE):
        z = x0 * a[j] + x1 * b[j] + c[j]      # 0.5 * (fc1 pre-activation)
        t = jnp.tanh(z)                       # one EUP push per hidden sigmoid
        term = t * d[j]
        acc = term if acc is None else acc + term

    u = acc + base                            # 0.5 * (fc2 pre-activation)
    o_ref[...] = 0.5 * jnp.tanh(u) + 0.5      # one EUP push for the output sigmoid


@jax.jit
def simple_nn_forward(x, w1, b1, w2, b2):
    """x: [B, INPUT_SIZE] f32; w1: [INPUT_SIZE, HIDDEN]; b1: [HIDDEN];
    w2: [HIDDEN, OUTPUT]; b2: [OUTPUT]. Returns [B, OUTPUT] f32."""
    B = x.shape[0]
    C = _LANES
    rows = _cdiv(max(B, 1), C)

    if rows <= 8:
        # Tiny batch: one block equal to the full (rows, C) extent.
        rows_p = rows
        tile_r = rows
    else:
        # Pad rows only to the sublane granule (<= 7 extra rows), then tile.
        rows_p = _round_up(rows, 8)
        # ~2 MiB x-tile per step, but keep >= ~4 grid steps for v7x's 2 TCs.
        tile_r = min(_MAX_TILE_R, _round_up(_cdiv(rows_p, 4), 8))
    grid_r = _cdiv(rows_p, tile_r)
    b_pad = rows_p * C

    # [B,2] -> [2,B] -> pad batch to rows_p*C -> [2, rows_p, C].
    # Under jit this is a single fused relayout pass; the kernel then reads x
    # exactly once in a fully (8,128)-dense layout.
    # TODO(synk): produce x in this [2, rows, C] layout upstream to avoid the
    # transpose pass entirely.
    xt = jnp.asarray(x, jnp.float32).T                       # [2, B]
    xt = jnp.pad(xt, ((0, 0), (0, b_pad - B)))               # [2, b_pad]
    xt = xt.reshape(INPUT_SIZE, rows_p, C)                   # [2, rows_p, C]

    params = jnp.concatenate([
        jnp.asarray(w1, jnp.float32).reshape(-1),            # row-major [2,5]
        jnp.asarray(b1, jnp.float32).reshape(-1),
        jnp.asarray(w2, jnp.float32).reshape(-1),            # row-major [5,1]
        jnp.asarray(b2, jnp.float32).reshape(-1),
    ])                                                       # [21]

    cost = pl.CostEstimate(
        flops=32 * b_pad,
        transcendentals=(HIDDEN_SIZE + OUTPUT_SIZE) * b_pad,
        bytes_accessed=4 * b_pad * (INPUT_SIZE + OUTPUT_SIZE) + 4 * _N_PARAMS,
    )

    out_p = pl.pallas_call(
        _mlp_kernel,
        out_shape=jax.ShapeDtypeStruct((rows_p, C), jnp.float32),
        grid=(grid_r,),
        in_specs=[
            pl.BlockSpec(memory_space=pltpu.MemorySpace.SMEM),            # params
            pl.BlockSpec((INPUT_SIZE, tile_r, C), lambda i: (0, i, 0)),   # x tile
        ],
        out_specs=pl.BlockSpec((tile_r, C), lambda i: (i, 0)),
        compiler_params=pltpu.CompilerParams(
            dimension_semantics=("parallel",),   # megacore-friendly on v7x
        ),
        cost_estimate=cost,
    )(params, xt)

    return out_p.reshape(-1)[:B].reshape(B, OUTPUT_SIZE)


def init_params(key):
    """Deterministic init mimicking PyTorch nn.Linear defaults:
    U(-1/sqrt(fan_in), 1/sqrt(fan_in)). Stored as [in, out]."""
    k1, k2, k3, k4 = jax.random.split(key, 4)
    bound1 = 1.0 / jnp.sqrt(jnp.float32(INPUT_SIZE))
    bound2 = 1.0 / jnp.sqrt(jnp.float32(HIDDEN_SIZE))
    w1 = jax.random.uniform(k1, (INPUT_SIZE, HIDDEN_SIZE), jnp.float32,
                            -bound1, bound1)
    b1 = jax.random.uniform(k2, (HIDDEN_SIZE,), jnp.float32, -bound1, bound1)
    w2 = jax.random.uniform(k3, (HIDDEN_SIZE, OUTPUT_SIZE), jnp.float32,
                            -bound2, bound2)
    b2 = jax.random.uniform(k4, (OUTPUT_SIZE,), jnp.float32, -bound2, bound2)
    return w1, b1, w2, b2


if __name__ == "__main__":
    key = jax.random.PRNGKey(0)
    k_x, k_p = jax.random.split(key)

    batch = 8
    x = jax.random.normal(k_x, (batch, INPUT_SIZE), jnp.float32)
    w1, b1, w2, b2 = init_params(k_p)

    out = simple_nn_forward(x, w1, b1, w2, b2)
    out = jax.block_until_ready(out)

    # Pure-JAX reference check.
    h_ref = jax.nn.sigmoid(x @ w1 + b1)
    o_ref = jax.nn.sigmoid(h_ref @ w2 + b2)
    assert out.shape == (batch, OUTPUT_SIZE), out.shape
    assert jnp.allclose(out, o_ref, atol=1e-5, rtol=1e-5), "mismatch vs reference"

    print("KERNEL_OK")
</pallas_src>

<mosaic_0001>
module attributes {stable_mosaic.version = 11 : i64} {
  func.func @_mlp_kernel(%arg0: i32, %arg1: memref<21xf32, #tpu.memory_space<smem>>, %arg2: memref<2x1x512xf32, #tpu.memory_space<vmem>>, %arg3: memref<1x512xf32, #tpu.memory_space<vmem>>) attributes {dimension_semantics = [#tpu.dimension_semantics<parallel>], iteration_bounds = array<i64: 1>, scalar_prefetch = 0 : i64, scratch_operands = 0 : i64, tpu.core_type = #tpu.core_type<tc>, window_params = [{transform_indices = @transform_0, window_bounds = array<i64: 21>}, {transform_indices = @transform_1, window_bounds = array<i64: 2, 1, 512>}, {transform_indices = @transform_2, window_bounds = array<i64: 1, 512>}]} {
    %c0 = arith.constant 0 : index
    %0 = memref.load %arg1[%c0] : memref<21xf32, #tpu.memory_space<smem>>
    %cst = arith.constant 5.000000e-01 : f32
    %1 = arith.mulf %cst, %0 : f32
    %c1 = arith.constant 1 : index
    %2 = memref.load %arg1[%c1] : memref<21xf32, #tpu.memory_space<smem>>
    %cst_0 = arith.constant 5.000000e-01 : f32
    %3 = arith.mulf %cst_0, %2 : f32
    %c2 = arith.constant 2 : index
    %4 = memref.load %arg1[%c2] : memref<21xf32, #tpu.memory_space<smem>>
    %cst_1 = arith.constant 5.000000e-01 : f32
    %5 = arith.mulf %cst_1, %4 : f32
    %c3 = arith.constant 3 : index
    %6 = memref.load %arg1[%c3] : memref<21xf32, #tpu.memory_space<smem>>
    %cst_2 = arith.constant 5.000000e-01 : f32
    %7 = arith.mulf %cst_2, %6 : f32
    %c4 = arith.constant 4 : index
    %8 = memref.load %arg1[%c4] : memref<21xf32, #tpu.memory_space<smem>>
    %cst_3 = arith.constant 5.000000e-01 : f32
    %9 = arith.mulf %cst_3, %8 : f32
    %c5 = arith.constant 5 : index
    %10 = memref.load %arg1[%c5] : memref<21xf32, #tpu.memory_space<smem>>
    %cst_4 = arith.constant 5.000000e-01 : f32
    %11 = arith.mulf %cst_4, %10 : f32
    %c6 = arith.constant 6 : index
    %12 = memref.load %arg1[%c6] : memref<21xf32, #tpu.memory_space<smem>>
    %cst_5 = arith.constant 5.000000e-01 : f32
    %13 = arith.mulf %cst_5, %12 : f32
    %c7 = arith.constant 7 : index
    %14 = memref.load %arg1[%c7] : memref<21xf32, #tpu.memory_space<smem>>
    %cst_6 = arith.constant 5.000000e-01 : f32
    %15 = arith.mulf %cst_6, %14 : f32
    %c8 = arith.constant 8 : index
    %16 = memref.load %arg1[%c8] : memref<21xf32, #tpu.memory_space<smem>>
    %cst_7 = arith.constant 5.000000e-01 : f32
    %17 = arith.mulf %cst_7, %16 : f32
    %c9 = arith.constant 9 : index
    %18 = memref.load %arg1[%c9] : memref<21xf32, #tpu.memory_space<smem>>
    %cst_8 = arith.constant 5.000000e-01 : f32
    %19 = arith.mulf %cst_8, %18 : f32
    %c10 = arith.constant 10 : index
    %20 = memref.load %arg1[%c10] : memref<21xf32, #tpu.memory_space<smem>>
    %cst_9 = arith.constant 5.000000e-01 : f32
    %21 = arith.mulf %cst_9, %20 : f32
    %c11 = arith.constant 11 : index
    %22 = memref.load %arg1[%c11] : memref<21xf32, #tpu.memory_space<smem>>
    %cst_10 = arith.constant 5.000000e-01 : f32
    %23 = arith.mulf %cst_10, %22 : f32
    %c12 = arith.constant 12 : index
    %24 = memref.load %arg1[%c12] : memref<21xf32, #tpu.memory_space<smem>>
    %cst_11 = arith.constant 5.000000e-01 : f32
    %25 = arith.mulf %cst_11, %24 : f32
    %c13 = arith.constant 13 : index
    %26 = memref.load %arg1[%c13] : memref<21xf32, #tpu.memory_space<smem>>
    %cst_12 = arith.constant 5.000000e-01 : f32
    %27 = arith.mulf %cst_12, %26 : f32
    %c14 = arith.constant 14 : index
    %28 = memref.load %arg1[%c14] : memref<21xf32, #tpu.memory_space<smem>>
    %cst_13 = arith.constant 5.000000e-01 : f32
    %29 = arith.mulf %cst_13, %28 : f32
    %c15 = arith.constant 15 : index
    %30 = memref.load %arg1[%c15] : memref<21xf32, #tpu.memory_space<smem>>
    %cst_14 = arith.constant 2.500000e-01 : f32
    %31 = arith.mulf %cst_14, %30 : f32
    %c16 = arith.constant 16 : index
    %32 = memref.load %arg1[%c16] : memref<21xf32, #tpu.memory_space<smem>>
    %cst_15 = arith.constant 2.500000e-01 : f32
    %33 = arith.mulf %cst_15, %32 : f32
    %c17 = arith.constant 17 : index
    %34 = memref.load %arg1[%c17] : memref<21xf32, #tpu.memory_space<smem>>
    %cst_16 = arith.constant 2.500000e-01 : f32
    %35 = arith.mulf %cst_16, %34 : f32
    %c18 = arith.constant 18 : index
    %36 = memref.load %arg1[%c18] : memref<21xf32, #tpu.memory_space<smem>>
    %cst_17 = arith.constant 2.500000e-01 : f32
    %37 = arith.mulf %cst_17, %36 : f32
    %c19 = arith.constant 19 : index
    %38 = memref.load %arg1[%c19] : memref<21xf32, #tpu.memory_space<smem>>
    %cst_18 = arith.constant 2.500000e-01 : f32
    %39 = arith.mulf %cst_18, %38 : f32
    %c20 = arith.constant 20 : index
    %40 = memref.load %arg1[%c20] : memref<21xf32, #tpu.memory_space<smem>>
    %cst_19 = arith.constant 5.000000e-01 : f32
    %41 = arith.mulf %cst_19, %40 : f32
    %c15_20 = arith.constant 15 : index
    %42 = memref.load %arg1[%c15_20] : memref<21xf32, #tpu.memory_space<smem>>
    %cst_21 = arith.constant 2.500000e-01 : f32
    %43 = arith.mulf %cst_21, %42 : f32
    %44 = arith.addf %41, %43 : f32
    %c16_22 = arith.constant 16 : index
    %45 = memref.load %arg1[%c16_22] : memref<21xf32, #tpu.memory_space<smem>>
    %cst_23 = arith.constant 2.500000e-01 : f32
    %46 = arith.mulf %cst_23, %45 : f32
    %47 = arith.addf %44, %46 : f32
    %c17_24 = arith.constant 17 : index
    %48 = memref.load %arg1[%c17_24] : memref<21xf32, #tpu.memory_space<smem>>
    %cst_25 = arith.constant 2.500000e-01 : f32
    %49 = arith.mulf %cst_25, %48 : f32
    %50 = arith.addf %47, %49 : f32
    %c18_26 = arith.constant 18 : index
    %51 = memref.load %arg1[%c18_26] : memref<21xf32, #tpu.memory_space<smem>>
    %cst_27 = arith.constant 2.500000e-01 : f32
    %52 = arith.mulf %cst_27, %51 : f32
    %53 = arith.addf %50, %52 : f32
    %c19_28 = arith.constant 19 : index
    %54 = memref.load %arg1[%c19_28] : memref<21xf32, #tpu.memory_space<smem>>
    %cst_29 = arith.constant 2.500000e-01 : f32
    %55 = arith.mulf %cst_29, %54 : f32
    %56 = arith.addf %53, %55 : f32
    %c0_30 = arith.constant 0 : index
    %c0_31 = arith.constant 0 : index
    %c0_32 = arith.constant 0 : index
    %57 = vector.load %arg2[%c0_30, %c0_31, %c0_32] : memref<2x1x512xf32, #tpu.memory_space<vmem>>, vector<1x1x512xf32>
    %58 = vector.shape_cast %57 : vector<1x1x512xf32> to vector<1x512xf32>
    %c1_33 = arith.constant 1 : index
    %c0_34 = arith.constant 0 : index
    %c0_35 = arith.constant 0 : index
    %59 = vector.load %arg2[%c1_33, %c0_34, %c0_35] : memref<2x1x512xf32, #tpu.memory_space<vmem>>, vector<1x1x512xf32>
    %60 = vector.shape_cast %59 : vector<1x1x512xf32> to vector<1x512xf32>
    %61 = vector.broadcast %1 : f32 to vector<1x512xf32>
    %62 = arith.mulf %58, %61 : vector<1x512xf32>
    %63 = vector.broadcast %11 : f32 to vector<1x512xf32>
    %64 = arith.mulf %60, %63 : vector<1x512xf32>
    %65 = arith.addf %62, %64 : vector<1x512xf32>
    %66 = vector.broadcast %21 : f32 to vector<1x512xf32>
    %67 = arith.addf %65, %66 : vector<1x512xf32>
    %68 = math.tanh %67 : vector<1x512xf32>
    %69 = vector.broadcast %31 : f32 to vector<1x512xf32>
    %70 = arith.mulf %68, %69 : vector<1x512xf32>
    %71 = vector.broadcast %3 : f32 to vector<1x512xf32>
    %72 = arith.mulf %58, %71 : vector<1x512xf32>
    %73 = vector.broadcast %13 : f32 to vector<1x512xf32>
    %74 = arith.mulf %60, %73 : vector<1x512xf32>
    %75 = arith.addf %72, %74 : vector<1x512xf32>
    %76 = vector.broadcast %23 : f32 to vector<1x512xf32>
    %77 = arith.addf %75, %76 : vector<1x512xf32>
    %78 = math.tanh %77 : vector<1x512xf32>
    %79 = vector.broadcast %33 : f32 to vector<1x512xf32>
    %80 = arith.mulf %78, %79 : vector<1x512xf32>
    %81 = arith.addf %70, %80 : vector<1x512xf32>
    %82 = vector.broadcast %5 : f32 to vector<1x512xf32>
    %83 = arith.mulf %58, %82 : vector<1x512xf32>
    %84 = vector.broadcast %15 : f32 to vector<1x512xf32>
    %85 = arith.mulf %60, %84 : vector<1x512xf32>
    %86 = arith.addf %83, %85 : vector<1x512xf32>
    %87 = vector.broadcast %25 : f32 to vector<1x512xf32>
    %88 = arith.addf %86, %87 : vector<1x512xf32>
    %89 = math.tanh %88 : vector<1x512xf32>
    %90 = vector.broadcast %35 : f32 to vector<1x512xf32>
    %91 = arith.mulf %89, %90 : vector<1x512xf32>
    %92 = arith.addf %81, %91 : vector<1x512xf32>
    %93 = vector.broadcast %7 : f32 to vector<1x512xf32>
    %94 = arith.mulf %58, %93 : vector<1x512xf32>
    %95 = vector.broadcast %17 : f32 to vector<1x512xf32>
    %96 = arith.mulf %60, %95 : vector<1x512xf32>
    %97 = arith.addf %94, %96 : vector<1x512xf32>
    %98 = vector.broadcast %27 : f32 to vector<1x512xf32>
    %99 = arith.addf %97, %98 : vector<1x512xf32>
    %100 = math.tanh %99 : vector<1x512xf32>
    %101 = vector.broadcast %37 : f32 to vector<1x512xf32>
    %102 = arith.mulf %100, %101 : vector<1x512xf32>
    %103 = arith.addf %92, %102 : vector<1x512xf32>
    %104 = vector.broadcast %9 : f32 to vector<1x512xf32>
    %105 = arith.mulf %58, %104 : vector<1x512xf32>
    %106 = vector.broadcast %19 : f32 to vector<1x512xf32>
    %107 = arith.mulf %60, %106 : vector<1x512xf32>
    %108 = arith.addf %105, %107 : vector<1x512xf32>
    %109 = vector.broadcast %29 : f32 to vector<1x512xf32>
    %110 = arith.addf %108, %109 : vector<1x512xf32>
    %111 = math.tanh %110 : vector<1x512xf32>
    %112 = vector.broadcast %39 : f32 to vector<1x512xf32>
    %113 = arith.mulf %111, %112 : vector<1x512xf32>
    %114 = arith.addf %103, %113 : vector<1x512xf32>
    %115 = vector.broadcast %56 : f32 to vector<1x512xf32>
    %116 = arith.addf %114, %115 : vector<1x512xf32>
    %117 = math.tanh %116 : vector<1x512xf32>
    %cst_36 = arith.constant 5.000000e-01 : f32
    %118 = vector.broadcast %cst_36 : f32 to vector<1x512xf32>
    %119 = arith.mulf %118, %117 : vector<1x512xf32>
    %cst_37 = arith.constant 5.000000e-01 : f32
    %120 = vector.broadcast %cst_37 : f32 to vector<1x512xf32>
    %121 = arith.addf %119, %120 : vector<1x512xf32>
    %c0_38 = arith.constant 0 : index
    %c0_39 = arith.constant 0 : index
    %122 = vector.load %arg3[%c0_38, %c0_39] : memref<1x512xf32, #tpu.memory_space<vmem>>, vector<1x512xf32>
    tpu.vector_store %arg3[%c0_38, %c0_39], %121 {strides = array<i32>} : memref<1x512xf32, #tpu.memory_space<vmem>>, vector<1x512xf32>,
    return
  }
  func.func @transform_0(%arg0: i32) -> i32 {
    %c0_i32 = arith.constant 0 : i32
    %c0_i32_0 = arith.constant 0 : i32
    return %c0_i32 : i32
  }
  func.func @transform_1(%arg0: i32) -> (i32, i32, i32) {
    %c0_i32 = arith.constant 0 : i32
    %c0_i32_0 = arith.constant 0 : i32
    %c0_i32_1 = arith.constant 0 : i32
    return %c0_i32, %arg0, %c0_i32_0 : i32, i32, i32
  }
  func.func @transform_2(%arg0: i32) -> (i32, i32) {
    %c0_i32 = arith.constant 0 : i32
    %c0_i32_0 = arith.constant 0 : i32
    return %arg0, %c0_i32 : i32, i32
  }
}

</mosaic_0001>

<llo_original>
// kernel: simple_nn_forward.1
$region0: #{simple_nn_forward.1}
  #allocation0 [shape = 'u32[]', space=smem, size = 0x4, offset = 0x4, fixed_abs, tag = 'smem constant byte address 0x4 - core index']
  #allocation1 [shape = 'u32[144,128]{1,0:T(1,128)}', space=vmem, size = 0x12000, scoped, tag = 'internal scratch']
  %s0 = inlined_call_operand.vmem [shape: f32[21], index: 0, kind: input, shape index: {}]
  %s1 = inlined_call_operand.vmem [shape: f32[2,1,512], index: 1, kind: input, shape index: {}]
  %s2 = inlined_call_operand.vmem [shape: f32[1,512], index: 2, kind: output, shape index: {}]
  %s3 = sld [smem:[#allocation0]]
  $region22: #{simple_nn_forward.1} parent=0
    _
  %s5 = ssub.s32 1, %s3
  %s6 = scalar_select 0, %s5, %s3
  $region1: #{simple_nn_forward.1} parent=0
    #allocation2 [shape = 'u8[512]{0}', space=smem, size = 0x200, scoped, tag = 'input window, operand 0, single buffered']
    #allocation3 [shape = 's32[1]{0}', space=sflag, size = 0x4, scoped, tag = 'scoped memory for simple_nn_forward.1']
    %7 = vsyncpa [#allocation3], 0
    // Predicated region
    $region2: #{simple_nn_forward.1} parent=1 // pred_check
      _
    $region3: #{simple_nn_forward.1} parent=1 // pred_check_branch
      %9 = sbr.rel (0) target = $region5
    $region4: #{simple_nn_forward.1} parent=1 // pred_region
      %s11 = ssub.s32 16, 16
      %12 = vsyncadd [#allocation3], %s11
      %s14 = sshll.u32 %s0, 4
      %s15 = int_to_ptr.vmem [resolvable:$true] %s14
      %17 = dma.vmem_to_smem %s15, 16, [#allocation2], [#allocation3]
    $region5: #{simple_nn_forward.1} parent=1 // pred_fallthru
      _
    // Predicated region
    $region6: #{simple_nn_forward.1} parent=1 // pred_check
      _
    $region7: #{simple_nn_forward.1} parent=1 // pred_check_branch
      %19 = sbr.rel (0) target = $region9
    $region8: #{simple_nn_forward.1} parent=1 // pred_region
      _
    $region9: #{simple_nn_forward.1} parent=1 // pred_fallthru
      _
    // Predicated region
    $region10: #{simple_nn_forward.1} parent=1 // pred_check
      _
    $region11: #{simple_nn_forward.1} parent=1 // pred_check_branch
      %21 = sbr.rel (0) target = $region13
    $region12: #{simple_nn_forward.1} parent=1 // pred_region
      %22 = dma.done [#allocation3], 16
    $region13: #{simple_nn_forward.1} parent=1 // pred_fallthru
      _
    %23 = sfence
    %s24 = sld [smem:[#allocation2]]
    %s25 = smul.f32 %s24, 0.5
    %s26 = sld [smem:[#allocation2 + $0x1]]
    %s27 = smul.f32 %s26, 0.5
    %s28 = sld [smem:[#allocation2 + $0x2]]
    %s29 = smul.f32 %s28, 0.5
    %s30 = sld [smem:[#allocation2 + $0x3]]
    %s31 = smul.f32 %s30, 0.5
    %s32 = sld [smem:[#allocation2 + $0x4]]
    %s33 = smul.f32 %s32, 0.5
    %s34 = sld [smem:[#allocation2 + $0x5]]
    %s35 = smul.f32 %s34, 0.5
    %s36 = sld [smem:[#allocation2 + $0x6]]
    %s37 = smul.f32 %s36, 0.5
    %s38 = sld [smem:[#allocation2 + $0x7]]
    %s39 = smul.f32 %s38, 0.5
    %s40 = sld [smem:[#allocation2 + $0x8]]
    %s41 = smul.f32 %s40, 0.5
    %s42 = sld [smem:[#allocation2 + $0x9]]
    %s43 = smul.f32 %s42, 0.5
    %s44 = sld [smem:[#allocation2 + $0xa]]
    %s45 = smul.f32 %s44, 0.5
    %s46 = sld [smem:[#allocation2 + $0xb]]
    %s47 = smul.f32 %s46, 0.5
    %s48 = sld [smem:[#allocation2 + $0xc]]
    %s49 = smul.f32 %s48, 0.5
    %s50 = sld [smem:[#allocation2 + $0xd]]
    %s51 = smul.f32 %s50, 0.5
    %s52 = sld [smem:[#allocation2 + $0xe]]
    %s53 = smul.f32 %s52, 0.5
    %s54 = sld [smem:[#allocation2 + $0xf]]
    %s55 = smul.f32 %s54, 0.25
    %s56 = sld [smem:[#allocation2 + $0x10]]
    %s57 = smul.f32 %s56, 0.25
    %s58 = sld [smem:[#allocation2 + $0x11]]
    %s59 = smul.f32 %s58, 0.25
    %s60 = sld [smem:[#allocation2 + $0x12]]
    %s61 = smul.f32 %s60, 0.25
    %s62 = sld [smem:[#allocation2 + $0x13]]
    %s63 = smul.f32 %s62, 0.25
    %s64 = sld [smem:[#allocation2 + $0x14]]
    %s65 = smul.f32 %s64, 0.5
    %s66 = sadd.f32 %s65, %s55
    %s67 = sadd.f32 %s66, %s57
    %s68 = sadd.f32 %s67, %s59
    %s69 = sadd.f32 %s68, %s61
    %s70 = sadd.f32 %s69, %s63
    %v71 = vld [vmem:[%s1] sm:$0xf]
    %s72 = scalar_lea.vmem %s1, 4
    %v73 = vld [vmem:[%s72] sm:$0xf]
    %v74 = vstv %s25
    %v75 = vmul.f32 %v71, %v74
    %v76 = vstv %s35
    %v77 = vmul.f32 %v73, %v76
    %v78 = vadd.f32 %v75, %v77
    %v79 = vstv %s45
    %v80 = vadd.f32 %v78, %v79
    %v81 = vtanh.pop %v80
    %v82 = vstv %s55
    %v83 = vmul.f32 %v81, %v82
    %v84 = vstv %s27
    %v85 = vmul.f32 %v71, %v84
    %v86 = vstv %s37
    %v87 = vmul.f32 %v73, %v86
    %v88 = vadd.f32 %v85, %v87
    %v89 = vstv %s47
    %v90 = vadd.f32 %v88, %v89
    %v91 = vtanh.pop %v90
    %v92 = vstv %s57
    %v93 = vmul.f32 %v91, %v92
    %v94 = vadd.f32 %v83, %v93
    %v95 = vstv %s29
    %v96 = vmul.f32 %v71, %v95
    %v97 = vstv %s39
    %v98 = vmul.f32 %v73, %v97
    %v99 = vadd.f32 %v96, %v98
    %v100 = vstv %s49
    %v101 = vadd.f32 %v99, %v100
    %v102 = vtanh.pop %v101
    %v103 = vstv %s59
    %v104 = vmul.f32 %v102, %v103
    %v105 = vadd.f32 %v94, %v104
    %v106 = vstv %s31
    %v107 = vmul.f32 %v71, %v106
    %v108 = vstv %s41
    %v109 = vmul.f32 %v73, %v108
    %v110 = vadd.f32 %v107, %v109
    %v111 = vstv %s51
    %v112 = vadd.f32 %v110, %v111
    %v113 = vtanh.pop %v112
    %v114 = vstv %s61
    %v115 = vmul.f32 %v113, %v114
    %v116 = vadd.f32 %v105, %v115
    %v117 = vstv %s33
    %v118 = vmul.f32 %v71, %v117
    %v119 = vstv %s43
    %v120 = vmul.f32 %v73, %v119
    %v121 = vadd.f32 %v118, %v120
    %v122 = vstv %s53
    %v123 = vadd.f32 %v121, %v122
    %v124 = vtanh.pop %v123
    %v125 = vstv %s63
    %v126 = vmul.f32 %v124, %v125
    %v127 = vadd.f32 %v116, %v126
    %v128 = vstv %s70
    %v129 = vadd.f32 %v127, %v128
    %v130 = vtanh.pop %v129
    %v131 = vmul.f32 %v130, 0.5
    %v132 = vadd.f32 %v131, 0.5
    %v133 = vlaneseq
    %vm134 = vcmp.ge.s32.totalorder %v133, 0
    %vm135 = vcmp.lt.s32.totalorder %v133, 512
    %vm136 = vmand %vm134, %vm135
    %137 = vst.msk [vmem:[%s2] sm:$0xf] %vm136, %v132
    // Predicated region
    $region14: #{simple_nn_forward.1} parent=1 // pred_check
      _
    $region15: #{simple_nn_forward.1} parent=1 // pred_check_branch
      %139 = sbr.rel (0) target = $region17
    $region16: #{simple_nn_forward.1} parent=1 // pred_region
      _
    $region17: #{simple_nn_forward.1} parent=1 // pred_fallthru
      _
    // Predicated region
    $region18: #{simple_nn_forward.1} parent=1 // pred_check
      _
    $region19: #{simple_nn_forward.1} parent=1 // pred_check_branch
      %141 = sbr.rel (0) target = $region21
    $region20: #{simple_nn_forward.1} parent=1 // pred_region
      _
    $region21: #{simple_nn_forward.1} parent=1 // pred_fallthru
      _
    %142 = vsyncpa [#allocation3], 1

</llo_original>
